<compile_context>
chip_gen: v7x
topology: tpu7x:2x2x1
jax: 0.10.0
libtpu: 0.0.40
codegen_flags: <defaults>
</compile_context>

<pallas_src>
import jax
import jax.numpy as jnp
import numpy as np
from jax import lax
from jax.experimental import pallas as pl
from jax.experimental.pallas import tpu as pltpu


def _critic_kernel(x_ref, w1_ref, b1_ref, w2_ref, b2_ref,
                   w3_ref, b3_ref, w4_ref, b4_ref, out_ref):
    # x_ref: [bt, S]  (batch rows on sublanes, features on lanes)
    x = x_ref[...]

    # Layer 1: contract the feature axis of BOTH operands so the result is
    # [H, bt] with batch on the lane axis -- the transpose is folded into the
    # MXU operand staging instead of being a separate wrapper-side HBM pass.
    h = lax.dot_general(w1_ref[...], x, (((1,), (1,)), ((), ())),
                        preferred_element_type=jnp.float32) + b1_ref[...]
    h = jnp.maximum(h, 0.0)                              # [H, bt] lane-dense

    h = jnp.dot(w2_ref[...], h, preferred_element_type=jnp.float32) + b2_ref[...]
    h = jnp.maximum(h, 0.0)
    h = jnp.dot(w3_ref[...], h, preferred_element_type=jnp.float32) + b3_ref[...]
    h = jnp.maximum(h, 0.0)

    # Final Linear(H, 1): VPU broadcast-multiply + cross-sublane reduce instead
    # of a degenerate N=1 MXU matmul.  Result is a lane-dense [1, bt] slab.
    v = jnp.sum(h * w4_ref[...], axis=0, keepdims=True) + b4_ref[...]
    out_ref[...] = v.astype(out_ref.dtype)


def _round_up(x, m):
    return ((x + m - 1) // m) * m


def critic_forward(state, params, *, batch_tile=16384):
    """state: [B, state_dim] float32 -> value: [B, 1] float32."""
    w1, b1, w2, b2, w3, b3, w4, b4 = params
    B, S = state.shape
    H = w1.shape[0]

    # Lane-aligned output width; batch tile is a multiple of 128 lanes.
    b_aligned = _round_up(B, 128)
    bt = min(_round_up(batch_tile, 128), b_aligned)
    # Guarantee >=2 grid steps when possible so both v7x TensorCores get work
    # under dimension_semantics=("parallel",).  Harmless on v5e/v6e.
    if b_aligned > 128 and b_aligned // bt < 2:
        bt = _round_up(pl.cdiv(b_aligned, 2), 128)
    grid = (pl.cdiv(b_aligned, bt),)

    const = lambda i: (0, 0)   # weights/biases stay VMEM-resident across the grid
    out = pl.pallas_call(
        _critic_kernel,
        out_shape=jax.ShapeDtypeStruct((1, b_aligned), jnp.float32),
        grid=grid,
        in_specs=[
            pl.BlockSpec((bt, S), lambda i: (i, 0)),   # streamed state tile (no pad/transpose)
            pl.BlockSpec((H, S), const),               # w1
            pl.BlockSpec((H, 1), const),               # b1
            pl.BlockSpec((H, H), const),               # w2
            pl.BlockSpec((H, 1), const),               # b2
            pl.BlockSpec((H, H), const),               # w3
            pl.BlockSpec((H, 1), const),               # b3
            pl.BlockSpec((H, 1), const),               # w4 (column)
            pl.BlockSpec((1, 1), const),               # b4
        ],
        out_specs=pl.BlockSpec((1, bt), lambda i: (0, i)),
        compiler_params=pltpu.CompilerParams(
            dimension_semantics=("parallel",),          # megacore on v7x
            vmem_limit_bytes=48 * 1024 * 1024),         # headroom for 16K-lane tiles
    )(state, w1, b1, w2, b2, w3, b3, w4, b4)

    return out[0, :B].reshape(B, 1)


def init_critic_params(key, state_dim, hidden_dim):
    """Deterministic init mirroring PyTorch nn.Linear (uniform +-1/sqrt(fan_in)).

    Layout: weights [out, in] (PyTorch native), biases [out, 1].  The last
    weight is kept as a [hidden_dim, 1] column for the in-kernel VPU reduce.
    """
    dims = [(state_dim, hidden_dim),
            (hidden_dim, hidden_dim),
            (hidden_dim, hidden_dim),
            (hidden_dim, 1)]
    params = []
    for fan_in, fan_out in dims:
        key, kw, kb = jax.random.split(key, 3)
        bound = 1.0 / np.sqrt(fan_in)
        w = jax.random.uniform(kw, (fan_out, fan_in), jnp.float32, -bound, bound)
        b = jax.random.uniform(kb, (fan_out, 1), jnp.float32, -bound, bound)
        params += [w, b]
    params[6] = params[6].T            # [1, H] -> [H, 1] column for the kernel
    return tuple(params)


def critic_reference(state, params):
    """Pure-JAX reference (standard row-major orientation) for correctness."""
    w1, b1, w2, b2, w3, b3, w4, b4 = params
    h = jnp.maximum(state @ w1.T + b1.T, 0.0)
    h = jnp.maximum(h @ w2.T + b2.T, 0.0)
    h = jnp.maximum(h @ w3.T + b3.T, 0.0)
    return h @ w4 + b4.T               # w4 stored as [H, 1]


# TODO(synk): the PyTorch module also constructs torch.optim.Adam; only the
# forward pass is implemented here.

if __name__ == "__main__":
    key = jax.random.PRNGKey(0)
    batch, state_dim, hidden_dim = 8, 4, 32

    key, k_state = jax.random.split(key)
    state = jax.random.normal(k_state, (batch, state_dim), dtype=jnp.float32)
    params = init_critic_params(key, state_dim, hidden_dim)

    value = jax.block_until_ready(critic_forward(state, params))
    ref = critic_reference(state, params)
    np.testing.assert_allclose(np.asarray(value), np.asarray(ref),
                               rtol=1e-5, atol=1e-5)
    assert value.shape == (batch, 1)

    # Multi-tile grid path with a ragged last block (B not a multiple of 128).
    key, k_big = jax.random.split(key)
    big_state = jax.random.normal(k_big, (300, state_dim), dtype=jnp.float32)
    big_value = jax.block_until_ready(
        critic_forward(big_state, params, batch_tile=128))
    big_ref = critic_reference(big_state, params)
    np.testing.assert_allclose(np.asarray(big_value), np.asarray(big_ref),
                               rtol=1e-5, atol=1e-5)

    # Default-tile path: exercises the ">=2 grid steps" split + partial blocks.
    split_value = jax.block_until_ready(critic_forward(big_state, params))
    np.testing.assert_allclose(np.asarray(split_value), np.asarray(big_ref),
                               rtol=1e-5, atol=1e-5)

    print("KERNEL_OK")
</pallas_src>

<mosaic_0001>
module attributes {stable_mosaic.version = 11 : i64} {
  func.func @_critic_kernel(%arg0: i32, %arg1: memref<128x4xf32, #tpu.memory_space<vmem>>, %arg2: memref<32x4xf32, #tpu.memory_space<vmem>>, %arg3: memref<32x1xf32, #tpu.memory_space<vmem>>, %arg4: memref<32x32xf32, #tpu.memory_space<vmem>>, %arg5: memref<32x1xf32, #tpu.memory_space<vmem>>, %arg6: memref<32x32xf32, #tpu.memory_space<vmem>>, %arg7: memref<32x1xf32, #tpu.memory_space<vmem>>, %arg8: memref<32x1xf32, #tpu.memory_space<vmem>>, %arg9: memref<1x1xf32, #tpu.memory_space<vmem>>, %arg10: memref<1x128xf32, #tpu.memory_space<vmem>>) attributes {dimension_semantics = [#tpu.dimension_semantics<parallel>], iteration_bounds = array<i64: 1>, scalar_prefetch = 0 : i64, scratch_operands = 0 : i64, tpu.core_type = #tpu.core_type<tc>, window_params = [{transform_indices = @transform_0, window_bounds = array<i64: 128, 4>}, {pipeline_mode = #tpu.pipeline_mode<synchronous>, transform_indices = @transform_1, window_bounds = array<i64: 32, 4>}, {pipeline_mode = #tpu.pipeline_mode<synchronous>, transform_indices = @transform_2, window_bounds = array<i64: 32, 1>}, {pipeline_mode = #tpu.pipeline_mode<synchronous>, transform_indices = @transform_3, window_bounds = array<i64: 32, 32>}, {pipeline_mode = #tpu.pipeline_mode<synchronous>, transform_indices = @transform_4, window_bounds = array<i64: 32, 1>}, {pipeline_mode = #tpu.pipeline_mode<synchronous>, transform_indices = @transform_5, window_bounds = array<i64: 32, 32>}, {pipeline_mode = #tpu.pipeline_mode<synchronous>, transform_indices = @transform_6, window_bounds = array<i64: 32, 1>}, {pipeline_mode = #tpu.pipeline_mode<synchronous>, transform_indices = @transform_7, window_bounds = array<i64: 32, 1>}, {pipeline_mode = #tpu.pipeline_mode<synchronous>, transform_indices = @transform_8, window_bounds = array<i64: 1, 1>}, {transform_indices = @transform_9, window_bounds = array<i64: 1, 128>}]} {
    %c0 = arith.constant 0 : index
    %c0_0 = arith.constant 0 : index
    %0 = vector.load %arg1[%c0, %c0_0] : memref<128x4xf32, #tpu.memory_space<vmem>>, vector<128x4xf32>
    %c0_1 = arith.constant 0 : index
    %c0_2 = arith.constant 0 : index
    %1 = vector.load %arg2[%c0_1, %c0_2] : memref<32x4xf32, #tpu.memory_space<vmem>>, vector<32x4xf32>
    %cst = arith.constant dense<0.000000e+00> : vector<32x128xf32>
    %2 = tpu.matmul %1, %0, %cst {dimension_numbers = #tpu.dot_dimension_numbers<[1], [1], [0], [0], [0, 0, 1, 0], [], []>} : vector<32x4xf32>, vector<128x4xf32>, vector<32x128xf32> -> vector<32x128xf32>
    %c0_3 = arith.constant 0 : index
    %c0_4 = arith.constant 0 : index
    %3 = vector.load %arg3[%c0_3, %c0_4] : memref<32x1xf32, #tpu.memory_space<vmem>>, vector<32x1xf32>
    %4 = vector.broadcast %3 : vector<32x1xf32> to vector<32x128xf32>
    %5 = arith.addf %2, %4 : vector<32x128xf32>
    %cst_5 = arith.constant 0.000000e+00 : f32
    %6 = vector.broadcast %cst_5 : f32 to vector<32x128xf32>
    %7 = arith.maximumf %5, %6 : vector<32x128xf32>
    %c0_6 = arith.constant 0 : index
    %c0_7 = arith.constant 0 : index
    %8 = vector.load %arg4[%c0_6, %c0_7] : memref<32x32xf32, #tpu.memory_space<vmem>>, vector<32x32xf32>
    %cst_8 = arith.constant dense<0.000000e+00> : vector<32x128xf32>
    %9 = tpu.matmul %8, %7, %cst_8 {dimension_numbers = #tpu.dot_dimension_numbers<[1], [0], [0], [1], [0, 0, 1, 1], [], []>} : vector<32x32xf32>, vector<32x128xf32>, vector<32x128xf32> -> vector<32x128xf32>
    %c0_9 = arith.constant 0 : index
    %c0_10 = arith.constant 0 : index
    %10 = vector.load %arg5[%c0_9, %c0_10] : memref<32x1xf32, #tpu.memory_space<vmem>>, vector<32x1xf32>
    %11 = vector.broadcast %10 : vector<32x1xf32> to vector<32x128xf32>
    %12 = arith.addf %9, %11 : vector<32x128xf32>
    %cst_11 = arith.constant 0.000000e+00 : f32
    %13 = vector.broadcast %cst_11 : f32 to vector<32x128xf32>
    %14 = arith.maximumf %12, %13 : vector<32x128xf32>
    %c0_12 = arith.constant 0 : index
    %c0_13 = arith.constant 0 : index
    %15 = vector.load %arg6[%c0_12, %c0_13] : memref<32x32xf32, #tpu.memory_space<vmem>>, vector<32x32xf32>
    %cst_14 = arith.constant dense<0.000000e+00> : vector<32x128xf32>
    %16 = tpu.matmul %15, %14, %cst_14 {dimension_numbers = #tpu.dot_dimension_numbers<[1], [0], [0], [1], [0, 0, 1, 1], [], []>} : vector<32x32xf32>, vector<32x128xf32>, vector<32x128xf32> -> vector<32x128xf32>
    %c0_15 = arith.constant 0 : index
    %c0_16 = arith.constant 0 : index
    %17 = vector.load %arg7[%c0_15, %c0_16] : memref<32x1xf32, #tpu.memory_space<vmem>>, vector<32x1xf32>
    %18 = vector.broadcast %17 : vector<32x1xf32> to vector<32x128xf32>
    %19 = arith.addf %16, %18 : vector<32x128xf32>
    %cst_17 = arith.constant 0.000000e+00 : f32
    %20 = vector.broadcast %cst_17 : f32 to vector<32x128xf32>
    %21 = arith.maximumf %19, %20 : vector<32x128xf32>
    %c0_18 = arith.constant 0 : index
    %c0_19 = arith.constant 0 : index
    %22 = vector.load %arg8[%c0_18, %c0_19] : memref<32x1xf32, #tpu.memory_space<vmem>>, vector<32x1xf32>
    %23 = vector.broadcast %22 : vector<32x1xf32> to vector<32x128xf32>
    %24 = arith.mulf %21, %23 : vector<32x128xf32>
    %cst_20 = arith.constant dense<0.000000e+00> : vector<128xf32>
    %25 = vector.multi_reduction <add>, %24, %cst_20 [0] : vector<32x128xf32> to vector<128xf32>
    %26 = vector.shape_cast %25 : vector<128xf32> to vector<1x128xf32>
    %c0_21 = arith.constant 0 : index
    %c0_22 = arith.constant 0 : index
    %27 = vector.load %arg9[%c0_21, %c0_22] : memref<1x1xf32, #tpu.memory_space<vmem>>, vector<1x1xf32>
    %28 = vector.broadcast %27 : vector<1x1xf32> to vector<1x128xf32>
    %29 = arith.addf %26, %28 : vector<1x128xf32>
    %c0_23 = arith.constant 0 : index
    %c0_24 = arith.constant 0 : index
    %30 = vector.load %arg10[%c0_23, %c0_24] : memref<1x128xf32, #tpu.memory_space<vmem>>, vector<1x128xf32>
    tpu.vector_store %arg10[%c0_23, %c0_24], %29 {strides = array<i32>} : memref<1x128xf32, #tpu.memory_space<vmem>>, vector<1x128xf32>,
    return
  }
  func.func @transform_0(%arg0: i32) -> (i32, i32) {
    %c0_i32 = arith.constant 0 : i32
    %c0_i32_0 = arith.constant 0 : i32
    return %arg0, %c0_i32 : i32, i32
  }
  func.func @transform_1(%arg0: i32) -> (i32, i32) {
    %c0_i32 = arith.constant 0 : i32
    %c0_i32_0 = arith.constant 0 : i32
    %c0_i32_1 = arith.constant 0 : i32
    return %c0_i32, %c0_i32_0 : i32, i32
  }
  func.func @transform_2(%arg0: i32) -> (i32, i32) {
    %c0_i32 = arith.constant 0 : i32
    %c0_i32_0 = arith.constant 0 : i32
    %c0_i32_1 = arith.constant 0 : i32
    return %c0_i32, %c0_i32_0 : i32, i32
  }
  func.func @transform_3(%arg0: i32) -> (i32, i32) {
    %c0_i32 = arith.constant 0 : i32
    %c0_i32_0 = arith.constant 0 : i32
    %c0_i32_1 = arith.constant 0 : i32
    return %c0_i32, %c0_i32_0 : i32, i32
  }
  func.func @transform_4(%arg0: i32) -> (i32, i32) {
    %c0_i32 = arith.constant 0 : i32
    %c0_i32_0 = arith.constant 0 : i32
    %c0_i32_1 = arith.constant 0 : i32
    return %c0_i32, %c0_i32_0 : i32, i32
  }
  func.func @transform_5(%arg0: i32) -> (i32, i32) {
    %c0_i32 = arith.constant 0 : i32
    %c0_i32_0 = arith.constant 0 : i32
    %c0_i32_1 = arith.constant 0 : i32
    return %c0_i32, %c0_i32_0 : i32, i32
  }
  func.func @transform_6(%arg0: i32) -> (i32, i32) {
    %c0_i32 = arith.constant 0 : i32
    %c0_i32_0 = arith.constant 0 : i32
    %c0_i32_1 = arith.constant 0 : i32
    return %c0_i32, %c0_i32_0 : i32, i32
  }
  func.func @transform_7(%arg0: i32) -> (i32, i32) {
    %c0_i32 = arith.constant 0 : i32
    %c0_i32_0 = arith.constant 0 : i32
    %c0_i32_1 = arith.constant 0 : i32
    return %c0_i32, %c0_i32_0 : i32, i32
  }
  func.func @transform_8(%arg0: i32) -> (i32, i32) {
    %c0_i32 = arith.constant 0 : i32
    %c0_i32_0 = arith.constant 0 : i32
    %c0_i32_1 = arith.constant 0 : i32
    return %c0_i32, %c0_i32_0 : i32, i32
  }
  func.func @transform_9(%arg0: i32) -> (i32, i32) {
    %c0_i32 = arith.constant 0 : i32
    %c0_i32_0 = arith.constant 0 : i32
    return %c0_i32, %arg0 : i32, i32
  }
}

</mosaic_0001>

<llo_original>
// kernel: tpu_custom_call.1
$region0: #{tpu_custom_call.1}
  #allocation0 [shape = 'u32[]', space=smem, size = 0x4, offset = 0x4, fixed_abs, tag = 'smem constant byte address 0x4 - core index']
  #allocation1 [shape = 'u32[144,128]{1,0:T(1,128)}', space=vmem, size = 0x12000, scoped, tag = 'internal scratch']
  #allocation2 [shape = 'f32[1,1]{1,0:T(1,128)S(1)}', space=vmem, size = 0x200, scoped, tag = 'scoped memory for tpu_custom_call.1']
  %s0 = inlined_call_operand.vmem [shape: f32[8,4], index: 0, kind: input, shape index: {}]
  %s1 = inlined_call_operand.vmem [shape: f32[32,4], index: 1, kind: input, shape index: {}]
  %s2 = inlined_call_operand.vmem [shape: f32[32,1], index: 2, kind: input, shape index: {}]
  %s3 = inlined_call_operand.vmem [shape: f32[32,32], index: 3, kind: input, shape index: {}]
  %s4 = inlined_call_operand.vmem [shape: f32[32,1], index: 4, kind: input, shape index: {}]
  %s5 = inlined_call_operand.vmem [shape: f32[32,32], index: 5, kind: input, shape index: {}]
  %s6 = inlined_call_operand.vmem [shape: f32[32,1], index: 6, kind: input, shape index: {}]
  %s7 = inlined_call_operand.vmem [shape: f32[32,1], index: 7, kind: input, shape index: {}]
  %s8 = inlined_call_operand.<no memory space> [shape: f32[1,1], index: 8, kind: input, shape index: {}]
  %s9 = inlined_call_operand.hbm [shape: f32[1,128], index: 9, kind: output, shape index: {}]
  %s10 = sld [smem:[#allocation0]]
  $region46: #{tpu_custom_call.1} parent=0
    _
  %s12 = ssub.s32 1, %s10
  %s13 = scalar_select 0, %s12, %s10
  %v14 = vstv %s8
  %15 = vst [vmem:[#allocation2] sm:$0x1] %v14
  $region1: #{tpu_custom_call.1} parent=0
    #allocation3 [shape = 'u8[512]{0}', space=vmem, size = 0x400, scoped, tag = 'output window, operand 0, single buffered']
    #allocation4 [shape = 's32[1]{0}', space=sflag, size = 0x4, scoped, tag = 'scoped memory for tpu_custom_call.1']
    %16 = vsyncpa [#allocation4], 0
    // Predicated region
    $region2: #{tpu_custom_call.1} parent=1 // pred_check
      _
    $region3: #{tpu_custom_call.1} parent=1 // pred_check_branch
      %18 = sbr.rel (0) target = $region5
    $region4: #{tpu_custom_call.1} parent=1 // pred_region
      _
    $region5: #{tpu_custom_call.1} parent=1 // pred_fallthru
      _
    // Predicated region
    $region6: #{tpu_custom_call.1} parent=1 // pred_check
      _
    $region7: #{tpu_custom_call.1} parent=1 // pred_check_branch
      %20 = sbr.rel (0) target = $region9
    $region8: #{tpu_custom_call.1} parent=1 // pred_region
      _
    $region9: #{tpu_custom_call.1} parent=1 // pred_fallthru
      _
    // Predicated region
    $region10: #{tpu_custom_call.1} parent=1 // pred_check
      _
    $region11: #{tpu_custom_call.1} parent=1 // pred_check_branch
      %22 = sbr.rel (0) target = $region13
    $region12: #{tpu_custom_call.1} parent=1 // pred_region
      _
    $region13: #{tpu_custom_call.1} parent=1 // pred_fallthru
      _
    // Predicated region
    $region14: #{tpu_custom_call.1} parent=1 // pred_check
      _
    $region15: #{tpu_custom_call.1} parent=1 // pred_check_branch
      %24 = sbr.rel (0) target = $region17
    $region16: #{tpu_custom_call.1} parent=1 // pred_region
      _
    $region17: #{tpu_custom_call.1} parent=1 // pred_fallthru
      _
    // Predicated region
    $region18: #{tpu_custom_call.1} parent=1 // pred_check
      _
    $region19: #{tpu_custom_call.1} parent=1 // pred_check_branch
      %26 = sbr.rel (0) target = $region21
    $region20: #{tpu_custom_call.1} parent=1 // pred_region
      _
    $region21: #{tpu_custom_call.1} parent=1 // pred_fallthru
      _
    // Predicated region
    $region22: #{tpu_custom_call.1} parent=1 // pred_check
      _
    $region23: #{tpu_custom_call.1} parent=1 // pred_check_branch
      %28 = sbr.rel (0) target = $region25
    $region24: #{tpu_custom_call.1} parent=1 // pred_region
      _
    $region25: #{tpu_custom_call.1} parent=1 // pred_fallthru
      _
    // Predicated region
    $region26: #{tpu_custom_call.1} parent=1 // pred_check
      _
    $region27: #{tpu_custom_call.1} parent=1 // pred_check_branch
      %30 = sbr.rel (0) target = $region29
    $region28: #{tpu_custom_call.1} parent=1 // pred_region
      _
    $region29: #{tpu_custom_call.1} parent=1 // pred_fallthru
      _
    // Predicated region
    $region30: #{tpu_custom_call.1} parent=1 // pred_check
      _
    $region31: #{tpu_custom_call.1} parent=1 // pred_check_branch
      %32 = sbr.rel (0) target = $region33
    $region32: #{tpu_custom_call.1} parent=1 // pred_region
      _
    $region33: #{tpu_custom_call.1} parent=1 // pred_fallthru
      _
    // Predicated region
    $region34: #{tpu_custom_call.1} parent=1 // pred_check
      _
    $region35: #{tpu_custom_call.1} parent=1 // pred_check_branch
      %34 = sbr.rel (0) target = $region37
    $region36: #{tpu_custom_call.1} parent=1 // pred_region
      _
    $region37: #{tpu_custom_call.1} parent=1 // pred_fallthru
      _
    %v35 = vld [vmem:[%s0] sm:$0xff]
    %v36 = vld [vmem:[%s0 + $0x8] sm:$0xff]
    %v37 = vld [vmem:[%s0 + $0x10] sm:$0xff]
    %v38 = vld [vmem:[%s0 + $0x18] sm:$0xff]
    %v39 = vld [vmem:[%s0 + $0x20] sm:$0xff]
    %v40 = vld [vmem:[%s0 + $0x28] sm:$0xff]
    %v41 = vld [vmem:[%s0 + $0x30] sm:$0xff]
    %v42 = vld [vmem:[%s0 + $0x38] sm:$0xff]
    %v43 = vld [vmem:[%s0 + $0x40] sm:$0xff]
    %v44 = vld [vmem:[%s0 + $0x48] sm:$0xff]
    %v45 = vld [vmem:[%s0 + $0x50] sm:$0xff]
    %v46 = vld [vmem:[%s0 + $0x58] sm:$0xff]
    %v47 = vld [vmem:[%s0 + $0x60] sm:$0xff]
    %v48 = vld [vmem:[%s0 + $0x68] sm:$0xff]
    %v49 = vld [vmem:[%s0 + $0x70] sm:$0xff]
    %v50 = vld [vmem:[%s0 + $0x78] sm:$0xff]
    %v51 = vld [vmem:[%s1] sm:$0xff]
    %v52 = vld [vmem:[%s1 + $0x8] sm:$0xff]
    %v53 = vld [vmem:[%s1 + $0x10] sm:$0xff]
    %v54 = vld [vmem:[%s1 + $0x18] sm:$0xff]
    %v55 = vld [vmem:[%s2] sm:$0xff]
    %v56 = vld [vmem:[%s2 + $0x8] sm:$0xff]
    %v57 = vld [vmem:[%s2 + $0x10] sm:$0xff]
    %v58 = vld [vmem:[%s2 + $0x18] sm:$0xff]
    %60 = vset.pattern.permute.xlu0 0
    %61 = vperm.xlu0 %60, %v55
    %v62 = vpop.permute.xlu0 %61
    %65 = vset.pattern.permute.xlu0 0
    %66 = vperm.xlu0 %65, %v56
    %v67 = vpop.permute.xlu0 %66
    %70 = vset.pattern.permute.xlu0 0
    %71 = vperm.xlu0 %70, %v57
    %v72 = vpop.permute.xlu0 %71
    %75 = vset.pattern.permute.xlu0 0
    %76 = vperm.xlu0 %75, %v58
    %v77 = vpop.permute.xlu0 %76
    %vm79 = vcmask 31744
    %v81 = vsel %vm79, %v51, 0
    %v84 = vsel %vm79, %v52, 0
    %v87 = vsel %vm79, %v53, 0
    %v90 = vsel %vm79, %v54, 0
    %v93 = vsel %vm79, %v35, 0
    %v96 = vsel %vm79, %v36, 0
    %v99 = vsel %vm79, %v37, 0
    %v102 = vsel %vm79, %v38, 0
    %v105 = vsel %vm79, %v39, 0
    %v108 = vsel %vm79, %v40, 0
    %v111 = vsel %vm79, %v41, 0
    %v114 = vsel %vm79, %v42, 0
    %v117 = vsel %vm79, %v43, 0
    %v120 = vsel %vm79, %v44, 0
    %v123 = vsel %vm79, %v45, 0
    %v126 = vsel %vm79, %v46, 0
    %v129 = vsel %vm79, %v47, 0
    %v132 = vsel %vm79, %v48, 0
    %v135 = vsel %vm79, %v49, 0
    %v138 = vsel %vm79, %v50, 0
    %140 = vmatprep.subr.mxu0 0.0
    %141 = vmatpush1.xpose.msra.mxu0 %v93
    %142 = vmatprep.subr.mxu0 0.0
    %143 = vmatpush1.xpose.msra.mxu0 %v96
    %144 = vmatprep.subr.mxu0 0.0
    %145 = vmatpush1.xpose.msra.mxu0 %v99
    %146 = vmatprep.subr.mxu0 0.0
    %147 = vmatpush1.xpose.msra.mxu0 %v102
    %148 = vmatprep.subr.mxu0 0.0
    %149 = vmatpush1.xpose.msra.mxu0 %v105
    %150 = vmatprep.subr.mxu0 0.0
    %151 = vmatpush1.xpose.msra.mxu0 %v108
    %152 = vmatprep.subr.mxu0 0.0
    %153 = vmatpush1.xpose.msra.mxu0 %v111
    %154 = vmatprep.subr.mxu0 0.0
    %155 = vmatpush1.xpose.msra.mxu0 %v114
    %156 = vmatprep.subr.mxu0 0.0
    %157 = vmatpush1.xpose.msra.mxu0 %v117
    %158 = vmatprep.subr.mxu0 0.0
    %159 = vmatpush1.xpose.msra.mxu0 %v120
    %160 = vmatprep.subr.mxu0 0.0
    %161 = vmatpush1.xpose.msra.mxu0 %v123
    %162 = vmatprep.subr.mxu0 0.0
    %163 = vmatpush1.xpose.msra.mxu0 %v126
    %164 = vmatprep.subr.mxu0 0.0
    %165 = vmatpush1.xpose.msra.mxu0 %v129
    %166 = vmatprep.subr.mxu0 0.0
    %167 = vmatpush1.xpose.msra.mxu0 %v132
    %168 = vmatprep.subr.mxu0 0.0
    %169 = vmatpush1.xpose.msra.mxu0 %v135
    %170 = vmatprep.subr.mxu0 0.0
    %171 = vmatpush1.xpose.msra.mxu0 %v138
    %172 = vmatprep.subr.mxu0 0.0
    %173 = vmatpush1.xpose.msra.mxu0 0.0
    %174 = vmatprep.subr.mxu0 0.0
    %175 = vmatpush1.xpose.msra.mxu0 0.0
    %176 = vmatprep.subr.mxu0 0.0
    %177 = vmatpush1.xpose.msra.mxu0 0.0
    %178 = vmatprep.subr.mxu0 0.0
    %179 = vmatpush1.xpose.msra.mxu0 0.0
    %180 = vmatprep.subr.mxu0 0.0
    %181 = vmatpush1.xpose.msra.mxu0 0.0
    %182 = vmatprep.subr.mxu0 0.0
    %183 = vmatpush1.xpose.msra.mxu0 0.0
    %184 = vmatprep.subr.mxu0 0.0
    %185 = vmatpush1.xpose.msra.mxu0 0.0
    %186 = vmatprep.subr.mxu0 0.0
    %187 = vmatpush1.xpose.msra.mxu0 0.0
    %188 = vmatprep.subr.mxu0 0.0
    %189 = vmatpush1.xpose.msra.mxu0 0.0
    %190 = vmatprep.subr.mxu0 0.0
    %191 = vmatpush1.xpose.msra.mxu0 0.0
    %192 = vmatprep.subr.mxu0 0.0
    %193 = vmatpush1.xpose.msra.mxu0 0.0
    %194 = vmatprep.subr.mxu0 0.0
    %195 = vmatpush1.xpose.msra.mxu0 0.0
    %196 = vmatprep.subr.mxu0 0.0
    %197 = vmatpush1.xpose.msra.mxu0 0.0
    %198 = vmatprep.subr.mxu0 0.0
    %199 = vmatpush1.xpose.msra.mxu0 0.0
    %200 = vmatprep.subr.mxu0 0.0
    %201 = vmatpush1.xpose.msra.mxu0 0.0
    %202 = vmatprep.subr.mxu0 0.0
    %203 = vmatpush1.xpose.msra.mxu0 0.0
    %204 = vmatprep.mubr.f32.mxu0 0.0
    %205 = vmatmul.mubr.f32.gmra.mrb[0].mxu0 %v81
    %v206 = vpop.f32.mrb[0].mxu0
    %v207 = vadd.f32 %v62, %v206
    %v208 = vpop.f32.mrb[0].mxu0
    %209 = vmatprep.mubr.f32.mxu0 0.0
    %210 = vmatmul.mubr.f32.gmra.mrb[0].mxu0 %v84
    %v211 = vpop.f32.mrb[0].mxu0
    %v212 = vadd.f32 %v67, %v211
    %v213 = vpop.f32.mrb[0].mxu0
    %214 = vmatprep.mubr.f32.mxu0 0.0
    %215 = vmatmul.mubr.f32.gmra.mrb[0].mxu0 %v87
    %v216 = vpop.f32.mrb[0].mxu0
    %v217 = vadd.f32 %v72, %v216
    %v218 = vpop.f32.mrb[0].mxu0
    %219 = vmatprep.mubr.f32.mxu0 0.0
    %220 = vmatmul.mubr.f32.gmra.mrb[0].mxu0 %v90
    %v221 = vpop.f32.mrb[0].mxu0
    %v222 = vadd.f32 %v77, %v221
    %v223 = vpop.f32.mrb[0].mxu0
    %224 = vdwg.mxu0
    %v225 = vmax.f32 %v207, 0.0
    %v226 = vmax.f32 %v212, 0.0
    %v227 = vmax.f32 %v217, 0.0
    %v228 = vmax.f32 %v222, 0.0
    %v229 = vld [vmem:[%s3] sm:$0xff]
    %v230 = vld [vmem:[%s3 + $0x8] sm:$0xff]
    %v231 = vld [vmem:[%s3 + $0x10] sm:$0xff]
    %v232 = vld [vmem:[%s3 + $0x18] sm:$0xff]
    %v233 = vld [vmem:[%s4] sm:$0xff]
    %v234 = vld [vmem:[%s4 + $0x8] sm:$0xff]
    %v235 = vld [vmem:[%s4 + $0x10] sm:$0xff]
    %v236 = vld [vmem:[%s4 + $0x18] sm:$0xff]
    %238 = vset.pattern.permute.xlu0 0
    %239 = vperm.xlu0 %238, %v233
    %v240 = vpop.permute.xlu0 %239
    %243 = vset.pattern.permute.xlu0 0
    %244 = vperm.xlu0 %243, %v234
    %v245 = vpop.permute.xlu0 %244
    %248 = vset.pattern.permute.xlu0 0
    %249 = vperm.xlu0 %248, %v235
    %v250 = vpop.permute.xlu0 %249
    %253 = vset.pattern.permute.xlu0 0
    %254 = vperm.xlu0 %253, %v236
    %v255 = vpop.permute.xlu0 %254
    %vm257 = vcmask 261120
    %v259 = vsel %vm257, %v229, 0
    %v262 = vsel %vm257, %v230, 0
    %v265 = vsel %vm257, %v231, 0
    %v268 = vsel %vm257, %v232, 0
    %270 = vmatprep.subr.mxu0 0.0
    %271 = vmatpush1.msra.mxu0 %v225
    %272 = vmatprep.subr.mxu0 0.0
    %273 = vmatpush1.msra.mxu0 %v226
    %274 = vmatprep.subr.mxu0 0.0
    %275 = vmatpush1.msra.mxu0 %v227
    %276 = vmatprep.subr.mxu0 0.0
    %277 = vmatpush1.msra.mxu0 %v228
    %278 = vmatprep.subr.mxu0 0.0
    %279 = vmatpush1.msra.mxu0 0.0
    %280 = vmatprep.subr.mxu0 0.0
    %281 = vmatpush1.msra.mxu0 0.0
    %282 = vmatprep.subr.mxu0 0.0
    %283 = vmatpush1.msra.mxu0 0.0
    %284 = vmatprep.subr.mxu0 0.0
    %285 = vmatpush1.msra.mxu0 0.0
    %286 = vmatprep.subr.mxu0 0.0
    %287 = vmatpush1.msra.mxu0 0.0
    %288 = vmatprep.subr.mxu0 0.0
    %289 = vmatpush1.msra.mxu0 0.0
    %290 = vmatprep.subr.mxu0 0.0
    %291 = vmatpush1.msra.mxu0 0.0
    %292 = vmatprep.subr.mxu0 0.0
    %293 = vmatpush1.msra.mxu0 0.0
    %294 = vmatprep.subr.mxu0 0.0
    %295 = vmatpush1.msra.mxu0 0.0
    %296 = vmatprep.subr.mxu0 0.0
    %297 = vmatpush1.msra.mxu0 0.0
    %298 = vmatprep.subr.mxu0 0.0
    %299 = vmatpush1.msra.mxu0 0.0
    %300 = vmatprep.subr.mxu0 0.0
    %301 = vmatpush1.msra.mxu0 0.0
    %302 = vmatprep.subr.mxu0 0.0
    %303 = vmatpush1.msra.mxu0 0.0
    %304 = vmatprep.subr.mxu0 0.0
    %305 = vmatpush1.msra.mxu0 0.0
    %306 = vmatprep.subr.mxu0 0.0
    %307 = vmatpush1.msra.mxu0 0.0
    %308 = vmatprep.subr.mxu0 0.0
    %309 = vmatpush1.msra.mxu0 0.0
    %310 = vmatprep.subr.mxu0 0.0
    %311 = vmatpush1.msra.mxu0 0.0
    %312 = vmatprep.subr.mxu0 0.0
    %313 = vmatpush1.msra.mxu0 0.0
    %314 = vmatprep.subr.mxu0 0.0
    %315 = vmatpush1.msra.mxu0 0.0
    %316 = vmatprep.subr.mxu0 0.0
    %317 = vmatpush1.msra.mxu0 0.0
    %318 = vmatprep.subr.mxu0 0.0
    %319 = vmatpush1.msra.mxu0 0.0
    %320 = vmatprep.subr.mxu0 0.0
    %321 = vmatpush1.msra.mxu0 0.0
    %322 = vmatprep.subr.mxu0 0.0
    %323 = vmatpush1.msra.mxu0 0.0
    %324 = vmatprep.subr.mxu0 0.0
    %325 = vmatpush1.msra.mxu0 0.0
    %326 = vmatprep.subr.mxu0 0.0
    %327 = vmatpush1.msra.mxu0 0.0
    %328 = vmatprep.subr.mxu0 0.0
    %329 = vmatpush1.msra.mxu0 0.0
    %330 = vmatprep.subr.mxu0 0.0
    %331 = vmatpush1.msra.mxu0 0.0
    %332 = vmatprep.subr.mxu0 0.0
    %333 = vmatpush1.msra.mxu0 0.0
    %334 = vmatprep.mubr.f32.mxu0 0.0
    %335 = vmatmul.mubr.f32.gmra.mrb[0].mxu0 %v259
    %v336 = vpop.f32.mrb[0].mxu0
    %v337 = vadd.f32 %v240, %v336
    %v338 = vpop.f32.mrb[0].mxu0
    %339 = vmatprep.mubr.f32.mxu0 0.0
    %340 = vmatmul.mubr.f32.gmra.mrb[0].mxu0 %v262
    %v341 = vpop.f32.mrb[0].mxu0
    %v342 = vadd.f32 %v245, %v341
    %v343 = vpop.f32.mrb[0].mxu0
    %344 = vmatprep.mubr.f32.mxu0 0.0
    %345 = vmatmul.mubr.f32.gmra.mrb[0].mxu0 %v265
    %v346 = vpop.f32.mrb[0].mxu0
    %v347 = vadd.f32 %v250, %v346
    %v348 = vpop.f32.mrb[0].mxu0
    %349 = vmatprep.mubr.f32.mxu0 0.0
    %350 = vmatmul.mubr.f32.gmra.mrb[0].mxu0 %v268
    %v351 = vpop.f32.mrb[0].mxu0
    %v352 = vadd.f32 %v255, %v351
    %v353 = vpop.f32.mrb[0].mxu0
    %354 = vdwg.mxu0
    %v355 = vmax.f32 %v337, 0.0
    %v356 = vmax.f32 %v342, 0.0
    %v357 = vmax.f32 %v347, 0.0
    %v358 = vmax.f32 %v352, 0.0
    %v359 = vld [vmem:[%s5] sm:$0xff]
    %v360 = vld [vmem:[%s5 + $0x8] sm:$0xff]
    %v361 = vld [vmem:[%s5 + $0x10] sm:$0xff]
    %v362 = vld [vmem:[%s5 + $0x18] sm:$0xff]
    %v363 = vld [vmem:[%s6] sm:$0xff]
    %v364 = vld [vmem:[%s6 + $0x8] sm:$0xff]
    %v365 = vld [vmem:[%s6 + $0x10] sm:$0xff]
    %v366 = vld [vmem:[%s6 + $0x18] sm:$0xff]
    %368 = vset.pattern.permute.xlu0 0
    %369 = vperm.xlu0 %368, %v363
    %v370 = vpop.permute.xlu0 %369
    %373 = vset.pattern.permute.xlu0 0
    %374 = vperm.xlu0 %373, %v364
    %v375 = vpop.permute.xlu0 %374
    %378 = vset.pattern.permute.xlu0 0
    %379 = vperm.xlu0 %378, %v365
    %v380 = vpop.permute.xlu0 %379
    %383 = vset.pattern.permute.xlu0 0
    %384 = vperm.xlu0 %383, %v366
    %v385 = vpop.permute.xlu0 %384
    %v388 = vsel %vm257, %v359, 0
    %v391 = vsel %vm257, %v360, 0
    %v394 = vsel %vm257, %v361, 0
    %v397 = vsel %vm257, %v362, 0
    %399 = vmatprep.subr.mxu0 0.0
    %400 = vmatpush1.msra.mxu0 %v355
    %401 = vmatprep.subr.mxu0 0.0
    %402 = vmatpush1.msra.mxu0 %v356
    %403 = vmatprep.subr.mxu0 0.0
    %404 = vmatpush1.msra.mxu0 %v357
    %405 = vmatprep.subr.mxu0 0.0
    %406 = vmatpush1.msra.mxu0 %v358
    %407 = vmatprep.subr.mxu0 0.0
    %408 = vmatpush1.msra.mxu0 0.0
    %409 = vmatprep.subr.mxu0 0.0
    %410 = vmatpush1.msra.mxu0 0.0
    %411 = vmatprep.subr.mxu0 0.0
    %412 = vmatpush1.msra.mxu0 0.0
    %413 = vmatprep.subr.mxu0 0.0
    %414 = vmatpush1.msra.mxu0 0.0
    %415 = vmatprep.subr.mxu0 0.0
    %416 = vmatpush1.msra.mxu0 0.0
    %417 = vmatprep.subr.mxu0 0.0
    %418 = vmatpush1.msra.mxu0 0.0
    %419 = vmatprep.subr.mxu0 0.0
    %420 = vmatpush1.msra.mxu0 0.0
    %421 = vmatprep.subr.mxu0 0.0
    %422 = vmatpush1.msra.mxu0 0.0
    %423 = vmatprep.subr.mxu0 0.0
    %424 = vmatpush1.msra.mxu0 0.0
    %425 = vmatprep.subr.mxu0 0.0
    %426 = vmatpush1.msra.mxu0 0.0
    %427 = vmatprep.subr.mxu0 0.0
    %428 = vmatpush1.msra.mxu0 0.0
    %429 = vmatprep.subr.mxu0 0.0
    %430 = vmatpush1.msra.mxu0 0.0
    %431 = vmatprep.subr.mxu0 0.0
    %432 = vmatpush1.msra.mxu0 0.0
    %433 = vmatprep.subr.mxu0 0.0
    %434 = vmatpush1.msra.mxu0 0.0
    %435 = vmatprep.subr.mxu0 0.0
    %436 = vmatpush1.msra.mxu0 0.0
    %437 = vmatprep.subr.mxu0 0.0
    %438 = vmatpush1.msra.mxu0 0.0
    %439 = vmatprep.subr.mxu0 0.0
    %440 = vmatpush1.msra.mxu0 0.0
    %441 = vmatprep.subr.mxu0 0.0
    %442 = vmatpush1.msra.mxu0 0.0
    %443 = vmatprep.subr.mxu0 0.0
    %444 = vmatpush1.msra.mxu0 0.0
    %445 = vmatprep.subr.mxu0 0.0
    %446 = vmatpush1.msra.mxu0 0.0
    %447 = vmatprep.subr.mxu0 0.0
    %448 = vmatpush1.msra.mxu0 0.0
    %449 = vmatprep.subr.mxu0 0.0
    %450 = vmatpush1.msra.mxu0 0.0
    %451 = vmatprep.subr.mxu0 0.0
    %452 = vmatpush1.msra.mxu0 0.0
    %453 = vmatprep.subr.mxu0 0.0
    %454 = vmatpush1.msra.mxu0 0.0
    %455 = vmatprep.subr.mxu0 0.0
    %456 = vmatpush1.msra.mxu0 0.0
    %457 = vmatprep.subr.mxu0 0.0
    %458 = vmatpush1.msra.mxu0 0.0
    %459 = vmatprep.subr.mxu0 0.0
    %460 = vmatpush1.msra.mxu0 0.0
    %461 = vmatprep.subr.mxu0 0.0
    %462 = vmatpush1.msra.mxu0 0.0
    %463 = vmatprep.mubr.f32.mxu0 0.0
    %464 = vmatmul.mubr.f32.gmra.mrb[0].mxu0 %v388
    %v465 = vpop.f32.mrb[0].mxu0
    %v466 = vadd.f32 %v370, %v465
    %v467 = vpop.f32.mrb[0].mxu0
    %468 = vmatprep.mubr.f32.mxu0 0.0
    %469 = vmatmul.mubr.f32.gmra.mrb[0].mxu0 %v391
    %v470 = vpop.f32.mrb[0].mxu0
    %v471 = vadd.f32 %v375, %v470
    %v472 = vpop.f32.mrb[0].mxu0
    %473 = vmatprep.mubr.f32.mxu0 0.0
    %474 = vmatmul.mubr.f32.gmra.mrb[0].mxu0 %v394
    %v475 = vpop.f32.mrb[0].mxu0
    %v476 = vadd.f32 %v380, %v475
    %v477 = vpop.f32.mrb[0].mxu0
    %478 = vmatprep.mubr.f32.mxu0 0.0
    %479 = vmatmul.mubr.f32.gmra.mrb[0].mxu0 %v397
    %v480 = vpop.f32.mrb[0].mxu0
    %v481 = vadd.f32 %v385, %v480
    %v482 = vpop.f32.mrb[0].mxu0
    %483 = vdwg.mxu0
    %v484 = vmax.f32 %v466, 0.0
    %v485 = vmax.f32 %v471, 0.0
    %v486 = vmax.f32 %v476, 0.0
    %v487 = vmax.f32 %v481, 0.0
    %v488 = vld [vmem:[%s7] sm:$0xff]
    %v489 = vld [vmem:[%s7 + $0x8] sm:$0xff]
    %v490 = vld [vmem:[%s7 + $0x10] sm:$0xff]
    %v491 = vld [vmem:[%s7 + $0x18] sm:$0xff]
    %493 = vset.pattern.permute.xlu0 0
    %494 = vperm.xlu0 %493, %v488
    %v495 = vpop.permute.xlu0 %494
    %498 = vset.pattern.permute.xlu0 0
    %499 = vperm.xlu0 %498, %v489
    %v500 = vpop.permute.xlu0 %499
    %503 = vset.pattern.permute.xlu0 0
    %504 = vperm.xlu0 %503, %v490
    %v505 = vpop.permute.xlu0 %504
    %508 = vset.pattern.permute.xlu0 0
    %509 = vperm.xlu0 %508, %v491
    %v510 = vpop.permute.xlu0 %509
    %v512 = vmul.f32 %v484, %v495
    %v513 = vmul.f32 %v485, %v500
    %v514 = vmul.f32 %v486, %v505
    %v515 = vmul.f32 %v487, %v510
    %v516 = vadd.f32 %v512, %v513
    %v517 = vadd.f32 %v516, %v514
    %v518 = vadd.f32 %v517, %v515
    %v519 = vrot.slane %v518, 4
    %v520 = vadd.f32 %v518, %v519
    %v521 = vrot.slane %v520, 2
    %v522 = vadd.f32 %v520, %v521
    %v523 = vrot.slane %v522, 1
    %v524 = vadd.f32 %v522, %v523
    %v525 = vld [vmem:[#allocation2] sm:$0x1]
    %527 = vset.pattern.permute.xlu0 0
    %528 = vperm.xlu0 %527, %v525
    %v529 = vpop.permute.xlu0 %528
    %v531 = vlaneseq
    %v532 = vshrl.u32 %v531, 7
    %v533 = vsub.s32 0, %v532
    %v534 = vrot.slane %v529, %v533
    %v535 = vadd.f32 %v524, %v534
    %536 = vst [vmem:[#allocation3] sm:$0x1] %v535
    // Predicated region
    $region38: #{tpu_custom_call.1} parent=1 // pred_check
      _
    $region39: #{tpu_custom_call.1} parent=1 // pred_check_branch
      %538 = sbr.rel (0) target = $region41
    $region40: #{tpu_custom_call.1} parent=1 // pred_region
      %s540 = ssub.s32 16, 16
      %541 = vsyncadd [#allocation4], %s540
      %s543 = sshll.u32 [#allocation3], 4
      %s544 = int_to_ptr.vmem [resolvable:$true] %s543
      %546 = dma.vmem_to_hbm [thread:$0]  %s544, 16, %s9, [#allocation4]
    $region41: #{tpu_custom_call.1} parent=1 // pred_fallthru
      _
    // Predicated region
    $region42: #{tpu_custom_call.1} parent=1 // pred_check
      _
    $region43: #{tpu_custom_call.1} parent=1 // pred_check_branch
      %548 = sbr.rel (0) target = $region45
    $region44: #{tpu_custom_call.1} parent=1 // pred_region
      %549 = dma.done [#allocation4], 16
    $region45: #{tpu_custom_call.1} parent=1 // pred_fallthru
      _
    %550 = vsyncpa [#allocation4], 1

</llo_original>
